<compile_context>
chip_gen: v6e
topology: v6e:2x2x1
jax: 0.10.0
libtpu: 0.0.40
codegen_flags: <defaults>
</compile_context>

<pallas_src>
import jax
import jax.numpy as jnp
from jax.experimental import pallas as pl
from jax.experimental.pallas import tpu as pltpu


def _celu_kernel(x_ref, o_ref):
    # x_ref: (1, br, lw) input tile. o_ref: (1, 2, br, lw) output tile.
    x = x_ref[...]
    one = jnp.asarray(1.0, dtype=x.dtype)
    # exp(-|x|) - 1 is the "negative branch" value of ELU for both x and -x.
    em1 = jnp.exp(-jnp.abs(x)) - one
    pos = jnp.where(x > 0, x, em1)    # ELU(x)
    neg = jnp.where(x > 0, em1, -x)   # ELU(-x)
    o_ref[:, 0, :, :] = pos
    o_ref[:, 1, :, :] = neg


def celu(x: jax.Array) -> jax.Array:
    """Concatenated ELU: returns ELU(concat([x, -x], axis=1)). NCHW layout."""
    n, c, h, w = x.shape
    f = c * h * w
    dtype = x.dtype
    itemsize = jnp.dtype(dtype).itemsize

    # Lane width: largest multiple of 128 dividing the per-batch flattened size.
    lw = None
    for cand in (8192, 4096, 2048, 1024, 512, 256, 128):
        if f % cand == 0:
            lw = cand
            break
    if lw is None:
        lw = f  # full-extent fallback is always a legal block dim
    rows = f // lw

    # Row block: target ~1 MiB input tile (output tile is 2x), multiple of 8.
    target_rows = max(1, (1 << 20) // max(1, lw * itemsize))
    if target_rows >= rows:
        br = rows                      # full extent -> always legal
    else:
        br = max(8, (target_rows // 8) * 8)
        br = min(br, rows)

    x3 = x.reshape(n, rows, lw)
    n_row_blocks = pl.cdiv(rows, br)

    grid_spec = pltpu.PrefetchScalarGridSpec(
        num_scalar_prefetch=0,
        grid=(n, n_row_blocks),
        in_specs=[
            pl.BlockSpec((1, br, lw), lambda b, r: (b, r, 0)),
        ],
        out_specs=pl.BlockSpec((1, 2, br, lw), lambda b, r: (b, 0, r, 0)),
    )

    # in block + 2x-sized out block, each double-buffered, plus slack.
    block_bytes = br * lw * itemsize
    vmem_limit = int(min(max(8 * block_bytes + (4 << 20), 16 << 20), 48 << 20))

    out3 = pl.pallas_call(
        _celu_kernel,
        out_shape=jax.ShapeDtypeStruct((n, 2, rows, lw), dtype),
        grid_spec=grid_spec,
        compiler_params=pltpu.CompilerParams(
            dimension_semantics=("parallel", "parallel"),
            vmem_limit_bytes=vmem_limit,
        ),
    )(x3)

    # (N, 2, C*H*W) is contiguous-identical to (N, 2C, H, W) with the first C
    # channels = ELU(x) and the next C channels = ELU(-x).
    return out3.reshape(n, 2 * c, h, w)


def _celu_ref(x: jax.Array) -> jax.Array:
    """Pure-JAX reference mirroring the PyTorch module."""
    cat = jnp.concatenate([x, -x], axis=1)
    return jnp.where(cat > 0, cat, jnp.exp(jnp.minimum(cat, 0.0)) - 1.0)


if __name__ == "__main__":
    key = jax.random.PRNGKey(0)
    # Small shape consistent with a pixel-cnn++ feature map: (N, C, H, W)
    x = jax.random.normal(key, (2, 4, 16, 16), dtype=jnp.float32)

    out = celu(x)
    out = jax.block_until_ready(out)

    ref = _celu_ref(x)
    assert out.shape == (2, 8, 16, 16), out.shape
    assert out.dtype == jnp.float32, out.dtype
    assert jnp.allclose(out, ref, atol=1e-6, rtol=1e-6), "mismatch vs reference"

    print("KERNEL_OK")
</pallas_src>

<mosaic_0001>
module attributes {stable_mosaic.version = 11 : i64} {
  func.func @_celu_kernel(%arg0: i32, %arg1: i32, %arg2: memref<1x1x1024xf32, #tpu.memory_space<vmem>>, %arg3: memref<1x2x1x1024xf32, #tpu.memory_space<vmem>>) attributes {dimension_semantics = [#tpu.dimension_semantics<parallel>, #tpu.dimension_semantics<parallel>], iteration_bounds = array<i64: 2, 1>, scalar_prefetch = 0 : i64, scratch_operands = 0 : i64, tpu.core_type = #tpu.core_type<tc>, window_params = [{transform_indices = @transform_0, window_bounds = array<i64: 1, 1, 1024>}, {transform_indices = @transform_1, window_bounds = array<i64: 1, 2, 1, 1024>}]} {
    %c0 = arith.constant 0 : index
    %c0_0 = arith.constant 0 : index
    %c0_1 = arith.constant 0 : index
    %0 = vector.load %arg2[%c0, %c0_0, %c0_1] : memref<1x1x1024xf32, #tpu.memory_space<vmem>>, vector<1x1x1024xf32>
    %1 = math.absf %0 : vector<1x1x1024xf32>
    %cst = arith.constant 0.000000e+00 : f32
    %2 = vector.broadcast %cst : f32 to vector<1x1x1024xf32>
    %3 = arith.subf %2, %1 : vector<1x1x1024xf32>
    %4 = math.exp %3 : vector<1x1x1024xf32>
    %cst_2 = arith.constant 1.000000e+00 : f32
    %5 = vector.broadcast %cst_2 : f32 to vector<1x1x1024xf32>
    %6 = arith.subf %4, %5 : vector<1x1x1024xf32>
    %cst_3 = arith.constant 0.000000e+00 : f32
    %7 = vector.broadcast %cst_3 : f32 to vector<1x1x1024xf32>
    %8 = arith.cmpf ogt, %0, %7 : vector<1x1x1024xf32>
    %9 = arith.select %8, %0, %6 : vector<1x1x1024xi1>, vector<1x1x1024xf32>
    %cst_4 = arith.constant 0.000000e+00 : f32
    %10 = vector.broadcast %cst_4 : f32 to vector<1x1x1024xf32>
    %11 = arith.cmpf ogt, %0, %10 : vector<1x1x1024xf32>
    %cst_5 = arith.constant 0.000000e+00 : f32
    %12 = vector.broadcast %cst_5 : f32 to vector<1x1x1024xf32>
    %13 = arith.subf %12, %0 : vector<1x1x1024xf32>
    %14 = arith.select %11, %6, %13 : vector<1x1x1024xi1>, vector<1x1x1024xf32>
    %c0_6 = arith.constant 0 : index
    %c0_7 = arith.constant 0 : index
    %c0_8 = arith.constant 0 : index
    %c0_9 = arith.constant 0 : index
    %15 = vector.load %arg3[%c0_6, %c0_7, %c0_8, %c0_9] : memref<1x2x1x1024xf32, #tpu.memory_space<vmem>>, vector<1x1x1x1024xf32>
    %16 = vector.shape_cast %15 : vector<1x1x1x1024xf32> to vector<1x1x1024xf32>
    %17 = vector.shape_cast %9 : vector<1x1x1024xf32> to vector<1x1x1x1024xf32>
    tpu.vector_store %arg3[%c0_6, %c0_7, %c0_8, %c0_9], %17 {strides = array<i32>} : memref<1x2x1x1024xf32, #tpu.memory_space<vmem>>, vector<1x1x1x1024xf32>,
    %c0_10 = arith.constant 0 : index
    %c1 = arith.constant 1 : index
    %c0_11 = arith.constant 0 : index
    %c0_12 = arith.constant 0 : index
    %18 = vector.load %arg3[%c0_10, %c1, %c0_11, %c0_12] : memref<1x2x1x1024xf32, #tpu.memory_space<vmem>>, vector<1x1x1x1024xf32>
    %19 = vector.shape_cast %18 : vector<1x1x1x1024xf32> to vector<1x1x1024xf32>
    %20 = vector.shape_cast %14 : vector<1x1x1024xf32> to vector<1x1x1x1024xf32>
    tpu.vector_store %arg3[%c0_10, %c1, %c0_11, %c0_12], %20 {strides = array<i32>} : memref<1x2x1x1024xf32, #tpu.memory_space<vmem>>, vector<1x1x1x1024xf32>,
    return
  }
  func.func @transform_0(%arg0: i32, %arg1: i32) -> (i32, i32, i32) {
    %c0_i32 = arith.constant 0 : i32
    %c0_i32_0 = arith.constant 0 : i32
    return %arg0, %arg1, %c0_i32 : i32, i32, i32
  }
  func.func @transform_1(%arg0: i32, %arg1: i32) -> (i32, i32, i32, i32) {
    %c0_i32 = arith.constant 0 : i32
    %c0_i32_0 = arith.constant 0 : i32
    %c0_i32_1 = arith.constant 0 : i32
    return %arg0, %c0_i32, %arg1, %c0_i32_0 : i32, i32, i32, i32
  }
}

</mosaic_0001>

<llo_original>
// kernel: tpu_custom_call.1
$region0: #{tpu_custom_call.1}
  #allocation0 [shape = 'u32[]', space=smem, size = 0x4, offset = 0x4, fixed_abs, tag = 'smem constant byte address 0x4 - core index']
  #allocation1 [shape = 'u32[144,128]{1,0:T(1,128)}', space=vmem, size = 0x12000, scoped, tag = 'internal scratch']
  %s0 = inlined_call_operand.hbm [shape: f32[2,1,1024], index: 0, kind: input, shape index: {}]
  %s1 = inlined_call_operand.hbm [shape: f32[2,2,1,1024], index: 1, kind: output, shape index: {}]
  %s2 = sld [smem:[#allocation0]]
  $region41: #{tpu_custom_call.1} parent=0
    _
  %s4 = ssub.s32 1, %s2
  %s5 = scalar_select 0, %s4, %s2
  $region1: #{tpu_custom_call.1} parent=0
    #allocation2 [shape = 'u8[8192]{0}', space=vmem, size = 0x2000, scoped, tag = 'input window, operand 0']
    #allocation3 [shape = 's32[2]{0}', space=sflag, size = 0x8, scoped, tag = 'scoped memory for tpu_custom_call.1']
    #allocation4 [shape = 's32[2]{0}', space=sflag, size = 0x8, scoped, tag = 'scoped memory for tpu_custom_call.1']
    #allocation5 [shape = 'u8[16384]{0}', space=vmem, size = 0x4000, scoped, tag = 'output window, operand 0']
    %6 = vsyncpa [#allocation3], 0
    %s7 = scalar_lea.sflag [#allocation3], 1
    %8 = vsyncpa %s7, 0
    %9 = vsyncpa [#allocation4], 0
    %s10 = scalar_lea.sflag [#allocation4], 1
    %11 = vsyncpa %s10, 0
    loop: start=0, step=1, limit=4
    $region2: #{tpu_custom_call.1} parent=1 // loop_pre_header
      _
    $region3: #{tpu_custom_call.1} parent=1 // loop_header
      %s13 = sphi 0, %s17
      %p14 = scmp.ge.s32.totalorder %s13, 4
      %s20 = sphi 0, %s32
      %s21 = sphi 0, %s28
      %s22 = sphi 0, %s20
      %s23 = sphi 0, %s21
      %s24 = sphi 0, %s22
      %s25 = sphi 0, %s23
      %s37 = sphi 0, %s39
      %s40 = sphi 0, %s37
      %s41 = sphi 0, %s40
      %s57 = sphi 0, %s41
      %s65 = sphi 0, %s67
      %s68 = sphi 0, %s65
      %s69 = sphi 0, %s68
      %s85 = sphi 0, %s69
    $region4: #{tpu_custom_call.1} parent=1 // loop_header_branch
      %16 = sbr.rel (%p14) target = $region8
    $region5: #{tpu_custom_call.1} parent=1 // loop_body
      %s18 = ssub.s32 %s13, 1
      %s19 = ssub.s32 %s13, 2
      %s26 = sadd.s32 1, %s21
      %p27 = scmp.ge.s32.totalorder %s26, 1
      %s28 = scalar_select %p27, 0, %s26
      %s29 = sadd.s32 1, %s20
      %s30 = scalar_select %p27, %s29, %s20
      %p31 = scmp.ge.s32.totalorder %s30, 2
      %s32 = scalar_select %p31, 0, %s30
      %s33 = ssub.s32 %s20, %s32
      %s34 = ssub.s32 %s21, %s28
      %s35 = sor.u32 %s33, %s34
      %p36 = scmp.eq.s32.totalorder %s35, 0
      %s38 = sadd.s32 %s37, 1
      %s39 = scalar_select %p36, %s37, %s38
      %p42 = pneg %p36
      %p43 = scmp.eq.s32.totalorder %s13, 1
      %p44 = por %p42, %p43
      %p45 = scmp.ne.s32.totalorder %s37, %s40
      %p46 = scmp.eq.s32.totalorder %s13, 0
      %p47 = por %p45, %p46
      %p48 = scmp.ne.s32.totalorder %s37, %s40
      %p49 = scmp.eq.s32.totalorder %s18, 1
      %p50 = por %p48, %p49
      %p51 = scmp.ne.s32.totalorder %s40, %s41
      %p52 = scmp.eq.s32.totalorder %s18, 0
      %p53 = por %p51, %p52
      %p54 = scmp.ne.s32.totalorder %s40, %s41
      %p55 = scmp.eq.s32.totalorder %s19, 1
      %p56 = por %p54, %p55
      %p58 = scmp.ne.s32.totalorder %s41, %s57
      %p59 = scmp.eq.s32.totalorder %s19, 0
      %p60 = por %p58, %p59
      %s61 = ssub.s32 %s20, %s32
      %s62 = ssub.s32 %s21, %s28
      %s63 = sor.u32 %s61, %s62
      %p64 = scmp.eq.s32.totalorder %s63, 0
      %s66 = sadd.s32 %s65, 1
      %s67 = scalar_select %p64, %s65, %s66
      %p70 = pneg %p64
      %p71 = scmp.eq.s32.totalorder %s13, 1
      %p72 = por %p70, %p71
      %p73 = scmp.ne.s32.totalorder %s65, %s68
      %p74 = scmp.eq.s32.totalorder %s13, 0
      %p75 = por %p73, %p74
      %p76 = scmp.ne.s32.totalorder %s65, %s68
      %p77 = scmp.eq.s32.totalorder %s18, 1
      %p78 = por %p76, %p77
      %p79 = scmp.ne.s32.totalorder %s68, %s69
      %p80 = scmp.eq.s32.totalorder %s18, 0
      %p81 = por %p79, %p80
      %p82 = scmp.ne.s32.totalorder %s68, %s69
      %p83 = scmp.eq.s32.totalorder %s19, 1
      %p84 = por %p82, %p83
      %p86 = scmp.ne.s32.totalorder %s69, %s85
      %p87 = scmp.eq.s32.totalorder %s19, 0
      %p88 = por %p86, %p87
      %p89 = scmp.le.s32.totalorder 1, %s13
      %p90 = scmp.lt.s32.totalorder %s13, 3
      %p91 = pnand %p89, %p90
      %p92 = pneg %p91
      // Predicated region
      $region9: #{tpu_custom_call.1} parent=5 // pred_check
        _
      $region10: #{tpu_custom_call.1} parent=5 // pred_check_branch
        %94 = sbr.rel (%p91) target = $region12
      $region11: #{tpu_custom_call.1} parent=5 // pred_region
        %s95 = ssub.s32 %s13, 1
      $region12: #{tpu_custom_call.1} parent=5 // pred_fallthru
        _
      %p96 = scmp.lt.s32.totalorder %s13, 2
      // Predicated region
      $region13: #{tpu_custom_call.1} parent=5 // pred_check
        %p97 = pneg %p96
      $region14: #{tpu_custom_call.1} parent=5 // pred_check_branch
        %99 = sbr.rel (%p97) target = $region16
      $region15: #{tpu_custom_call.1} parent=5 // pred_region
        // Predicated region
        $region17: #{tpu_custom_call.1} parent=15 // pred_check
          %p100 = pneg %p47
        $region18: #{tpu_custom_call.1} parent=15 // pred_check_branch
          %102 = sbr.rel (%p100) target = $region20
        $region19: #{tpu_custom_call.1} parent=15 // pred_region
          %s103 = sand.u32 %s37, 1
          %s104 = scalar_lea.sflag [#allocation3], %s103
          %s105 = sand.u32 %s37, 1
          %s106 = smul.addr %s105, 8
          %s107 = scalar_lea.vmem [#allocation2], %s106
          %s109 = ssub.s32 128, 128
          %110 = vsyncadd %s104, %s109
          %s111 = smul.addr %s21, 8
          %s112 = smul.addr %s20, 8
          %s113 = sadd.s32 %s111, %s112
          %s114 = smul.addr %s113, 16
          %s115 = scalar_lea.hbm %s0, %s114
          %s117 = sshll.u32 %s107, 4
          %s118 = int_to_ptr.vmem [resolvable:$true] %s117
          %120 = dma.hbm_to_vmem [thread:$0]  %s115, 128, %s118, %s104
        $region20: #{tpu_custom_call.1} parent=15 // pred_fallthru
          _
      $region16: #{tpu_custom_call.1} parent=5 // pred_fallthru
        _
      %p121 = scmp.le.s32.totalorder 1, %s13
      %p122 = scmp.lt.s32.totalorder %s13, 3
      %p123 = pnand %p121, %p122
      %p124 = pneg %p123
      // Predicated region
      $region21: #{tpu_custom_call.1} parent=5 // pred_check
        _
      $region22: #{tpu_custom_call.1} parent=5 // pred_check_branch
        %126 = sbr.rel (%p123) target = $region24
      $region23: #{tpu_custom_call.1} parent=5 // pred_region
        %s127 = ssub.s32 %s13, 1
        %s128 = sand.u32 %s40, 1
        %s129 = scalar_lea.sflag [#allocation3], %s128
        %s130 = sand.u32 %s40, 1
        %s131 = smul.addr %s130, 8
        %s132 = scalar_lea.vmem [#allocation2], %s131
        // Predicated region
        $region25: #{tpu_custom_call.1} parent=23 // pred_check
          %p133 = pneg %p53
        $region26: #{tpu_custom_call.1} parent=23 // pred_check_branch
          %135 = sbr.rel (%p133) target = $region28
        $region27: #{tpu_custom_call.1} parent=23 // pred_region
          %136 = dma.done %s129, 128
        $region28: #{tpu_custom_call.1} parent=23 // pred_fallthru
          _
        %s137 = sand.u32 %s40, 1
        %s138 = scalar_lea.sflag [#allocation3], %s137
        %s139 = sand.u32 %s40, 1
        %s140 = smul.addr %s139, 8
        %s141 = scalar_lea.vmem [#allocation2], %s140
        %p142 = pneg %p53
        %p143 = pneg %p50
        %p144 = pneg %p81
        %p145 = pneg %p78
        %s146 = sand.u32 %s68, 1
        %s147 = scalar_lea.sflag [#allocation4], %s146
        %s148 = sand.u32 %s68, 1
        %s149 = smul.addr %s148, 16
        %s150 = scalar_lea.vmem [#allocation5], %s149
        %v151 = vld [vmem:[%s132] sm:$0xff]
        %v152 = vand.u32 2147483647, %v151
        %v153 = vsub.f32 0.0, %v152
        %v154 = vmul.f32 %v153, 1.442695
        %v155 = vpow.pop %v154
        %v156 = vsub.f32 %v155, 1.0
        %vm157 = vcmp.gt.f32.partialorder %v151, 0.0
        %v158 = vsel %vm157, %v151, %v156
        %v159 = vsub.f32 0.0, %v151
        %v160 = vsel %vm157, %v156, %v159
        %161 = vst [vmem:[%s150] sm:$0xff] %v158
        %s162 = scalar_lea.vmem %s150, 8 [#allocation5]
        %163 = vst [vmem:[%s162] sm:$0xff] %v160
        %s164 = sand.u32 %s68, 1
        %s165 = scalar_lea.sflag [#allocation4], %s164
        %s166 = sand.u32 %s68, 1
        %s167 = smul.addr %s166, 16
        %s168 = scalar_lea.vmem [#allocation5], %s167
        // Predicated region
        $region29: #{tpu_custom_call.1} parent=23 // pred_check
          %p169 = pneg %p78
        $region30: #{tpu_custom_call.1} parent=23 // pred_check_branch
          %171 = sbr.rel (%p169) target = $region32
        $region31: #{tpu_custom_call.1} parent=23 // pred_region
          %s173 = ssub.s32 256, 256
          %174 = vsyncadd %s165, %s173
          %s175 = smul.addr %s23, 8
          %s176 = smul.addr %s22, 16
          %s177 = sadd.s32 %s175, %s176
          %s178 = smul.addr %s177, 16
          %s179 = scalar_lea.hbm %s1, %s178
          %s180 = sshll.u32 %s168, 4
          %s181 = int_to_ptr.vmem [resolvable:$true] %s180
          %186 = dma.vmem_to_hbm [thread:$0]  %s181, 256, %s179, %s165, 128, 128, 8
        $region32: #{tpu_custom_call.1} parent=23 // pred_fallthru
          _
      $region24: #{tpu_custom_call.1} parent=5 // pred_fallthru
        _
      %p187 = scmp.le.s32.totalorder 2, %s13
      // Predicated region
      $region33: #{tpu_custom_call.1} parent=5 // pred_check
        %p188 = pneg %p187
      $region34: #{tpu_custom_call.1} parent=5 // pred_check_branch
        %190 = sbr.rel (%p188) target = $region36
      $region35: #{tpu_custom_call.1} parent=5 // pred_region
        %s191 = ssub.s32 %s13, 2
        // Predicated region
        $region37: #{tpu_custom_call.1} parent=35 // pred_check
          %p192 = pneg %p84
        $region38: #{tpu_custom_call.1} parent=35 // pred_check_branch
          %194 = sbr.rel (%p192) target = $region40
        $region39: #{tpu_custom_call.1} parent=35 // pred_region
          %s195 = sand.u32 %s69, 1
          %s196 = scalar_lea.sflag [#allocation4], %s195
          %s197 = sand.u32 %s69, 1
          %s198 = smul.addr %s197, 16
          %s199 = scalar_lea.vmem [#allocation5], %s198
          %200 = dma.done %s196, 256
        $region40: #{tpu_custom_call.1} parent=35 // pred_fallthru
          _
      $region36: #{tpu_custom_call.1} parent=5 // pred_fallthru
        _
    $region6: #{tpu_custom_call.1} parent=1 // loop_footer
      %s17 = sadd.s32 1, %s13
    $region7: #{tpu_custom_call.1} parent=1 // loop_footer_branch
      %12 = sbr.rel target = $region3
    $region8: #{tpu_custom_call.1} parent=1 // loop_exit
      _
    %201 = vsyncpa [#allocation3], 1
    %s202 = scalar_lea.sflag [#allocation3], 1
    %203 = vsyncpa %s202, 1
    %204 = vsyncpa [#allocation4], 1
    %s205 = scalar_lea.sflag [#allocation4], 1
    %206 = vsyncpa %s205, 1

</llo_original>
